<compile_context>
chip_gen: v5e
topology: v5e:2x2
jax: 0.10.0
libtpu: 0.0.40
codegen_flags: <defaults>
</compile_context>

<pallas_src>
import functools

import jax
import jax.numpy as jnp
from jax.experimental import pallas as pl
from jax.experimental.pallas import tpu as pltpu


def _round_up(x, m):
    return ((x + m - 1) // m) * m


def encoder_lstm_kernel(x_ref,       # (T*Bp, E)   time-major inputs, batch padded to Bp
                        wih_ref,     # (E, Hp)     RNN input->hidden (transposed, padded)
                        whh_ref,     # (Hp, Hp)    RNN hidden->hidden (transposed, padded)
                        brnn_ref,    # (1, Hp)     b_ih + b_hh (padded)
                        wconv_ref,   # (Hp, 3*Hp)  conv taps, lane-concatenated [W0|W1|W2]
                        bconv_ref,   # (1, Hp)     conv bias (padded)
                        out_ref,     # (Bp, Hp)    pooled output (padded)
                        seq_ref,     # VMEM ((T+2)*Bp, Hp) zero-padded RNN output sequence
                        *, T, Bp):
    Hp = out_ref.shape[1]

    # ---- Phase 1: hoisted input projection — ONE matmul for all timesteps, written
    #      straight into the sequence buffer rows 1..T (bias folded in once). ----
    proj = (jnp.dot(x_ref[...], wih_ref[...], preferred_element_type=jnp.float32)
            + brnn_ref[...])                                  # (T*Bp, Hp)
    seq_ref[pl.ds(Bp, T * Bp), :] = proj

    # Zero pad rows at both ends == Conv1d padding=1 (no masking needed later).
    zeros_bh = jnp.zeros((Bp, Hp), jnp.float32)
    seq_ref[pl.ds(0, Bp), :] = zeros_bh
    seq_ref[pl.ds((T + 1) * Bp, Bp), :] = zeros_bh

    # ---- Phase 2: RNN(relu) recurrence, in place, fully unrolled (T small & static).
    #      Per step only h @ W_hh hits the MXU; stores are whole-tile (Bp=8 sublanes).
    h = zeros_bh
    for t in range(T):
        row = (t + 1) * Bp
        pre = seq_ref[pl.ds(row, Bp), :] + jnp.dot(
            h, whh_ref[...], preferred_element_type=jnp.float32)
        h = jnp.maximum(pre, 0.0)
        seq_ref[pl.ds(row, Bp), :] = h

    # ---- Phase 3: Conv1d(k=3,pad=1) + ReLU + MaxPool as ONE batched matmul ----
    pc = jnp.dot(seq_ref[...], wconv_ref[...],
                 preferred_element_type=jnp.float32)          # ((T+2)*Bp, 3*Hp)
    c0 = pc[0:T * Bp, 0:Hp]                                   # h[t-1] @ W0
    c1 = pc[Bp:(T + 1) * Bp, Hp:2 * Hp]                       # h[t]   @ W1
    c2 = pc[2 * Bp:(T + 2) * Bp, 2 * Hp:3 * Hp]               # h[t+1] @ W2
    conv = jnp.maximum(c0 + c1 + c2 + bconv_ref[...], 0.0)    # bias added once, ReLU
    # (T*Bp, Hp) -> (T, Bp, Hp) is tile-aligned (Bp multiple of 8) => free view.
    out_ref[...] = jnp.max(conv.reshape(T, Bp, Hp), axis=0).astype(out_ref.dtype)


def prepare_params(w_ih, w_hh, b_ih, b_hh, w_conv, b_conv):
    """One-time weight preprocessing (hoisted out of the per-call path).
       w_ih: (H, E), w_hh: (H, H), b_ih/b_hh: (H,)   (PyTorch nn.RNN layout)
       w_conv: (H_out, H_in, 3), b_conv: (H_out,)    (PyTorch nn.Conv1d layout)"""
    H = w_hh.shape[0]
    Hp = _round_up(max(H, 128), 128)      # lane-dense hidden dim inside the kernel
    ph = Hp - H

    wih_t = jnp.pad(jnp.transpose(w_ih).astype(jnp.float32), ((0, 0), (0, ph)))   # (E, Hp)
    whh_t = jnp.pad(jnp.transpose(w_hh).astype(jnp.float32), ((0, ph), (0, ph)))  # (Hp, Hp)
    brnn = jnp.pad((b_ih + b_hh).reshape(1, H).astype(jnp.float32), ((0, 0), (0, ph)))
    # tap k: out[t] += h[t+k-1] @ w_conv[:, :, k].T  -> per-tap (H_in, H_out), padded,
    # then lane-concatenated into (Hp, 3*Hp) so the conv phase is one MXU matmul.
    wconv_k = jnp.pad(jnp.transpose(w_conv, (2, 1, 0)).astype(jnp.float32),
                      ((0, 0), (0, ph), (0, ph)))                                  # (3, Hp, Hp)
    wconv_cat = jnp.concatenate([wconv_k[0], wconv_k[1], wconv_k[2]], axis=1)      # (Hp, 3*Hp)
    bconv = jnp.pad(b_conv.reshape(1, H).astype(jnp.float32), ((0, 0), (0, ph)))
    params = dict(wih=wih_t, whh=whh_t, brnn=brnn, wconv=wconv_cat, bconv=bconv)
    return params, H


@functools.partial(jax.jit, static_argnames=("H",))
def encoder_lstm_apply(inputs, params, H):
    """inputs: (B, T, E) float32 (batch_first).  Returns (B, H)."""
    B, T, E = inputs.shape
    Hp = params["whh"].shape[0]
    Bp = _round_up(B, 8)                 # sublane-multiple batch inside the kernel

    # Time-major, batch padded to Bp, flattened to a lane-packed (T*Bp, E) slab.
    x = jnp.transpose(inputs, (1, 0, 2)).astype(jnp.float32)            # (T, B, E)
    x = jnp.pad(x, ((0, 0), (0, Bp - B), (0, 0))).reshape(T * Bp, E)    # (T*Bp, E)

    kernel = functools.partial(encoder_lstm_kernel, T=T, Bp=Bp)
    out_pad = pl.pallas_call(
        kernel,
        out_shape=jax.ShapeDtypeStruct((Bp, Hp), jnp.float32),
        in_specs=[pl.BlockSpec(memory_space=pltpu.MemorySpace.VMEM)] * 6,
        out_specs=pl.BlockSpec(memory_space=pltpu.MemorySpace.VMEM),
        scratch_shapes=[
            pltpu.VMEM(((T + 2) * Bp, Hp), jnp.float32),  # zero-padded RNN sequence
        ],
    )(x, params["wih"], params["whh"], params["brnn"],
      params["wconv"], params["bconv"])
    return out_pad[:B, :H]


def reference_forward(inputs, w_ih, w_hh, b_ih, b_hh, w_conv, b_conv):
    """Pure-JAX reference mirroring the PyTorch forward."""
    B, T, E = inputs.shape
    H = w_hh.shape[0]
    h = jnp.zeros((B, H), jnp.float32)
    outs = []
    for t in range(T):
        h = jax.nn.relu(inputs[:, t, :] @ w_ih.T + b_ih + h @ w_hh.T + b_hh)
        outs.append(h)
    seq = jnp.stack(outs, axis=1)                                      # (B, T, H)
    seq_pad = jnp.pad(seq, ((0, 0), (1, 1), (0, 0)))
    conv = jnp.zeros((B, T, H), jnp.float32)
    for k in range(3):
        conv = conv + seq_pad[:, k:k + T, :] @ w_conv[:, :, k].T
    conv = jax.nn.relu(conv + b_conv[None, None, :])
    return jnp.max(conv, axis=1)                                       # (B, H)


if __name__ == "__main__":
    B, T, E, H = 2, 8, 32, 32   # batch, max_length, word_embedding, hidden_size

    key = jax.random.PRNGKey(0)
    ks = jax.random.split(key, 7)
    scale = 0.1
    inputs = jax.random.normal(ks[0], (B, T, E), jnp.float32)
    w_ih = jax.random.uniform(ks[1], (H, E), jnp.float32, -scale, scale)
    w_hh = jax.random.uniform(ks[2], (H, H), jnp.float32, -scale, scale)
    b_ih = jax.random.uniform(ks[3], (H,), jnp.float32, -scale, scale)
    b_hh = jax.random.uniform(ks[4], (H,), jnp.float32, -scale, scale)
    w_conv = jax.random.uniform(ks[5], (H, H, 3), jnp.float32, -scale, scale)
    b_conv = jax.random.uniform(ks[6], (H,), jnp.float32, -scale, scale)

    params, H_static = prepare_params(w_ih, w_hh, b_ih, b_hh, w_conv, b_conv)
    out = encoder_lstm_apply(inputs, params, H_static)
    out = jax.block_until_ready(out)

    ref = reference_forward(inputs, w_ih, w_hh, b_ih, b_hh, w_conv, b_conv)
    assert out.shape == (B, H)
    assert jnp.allclose(out, ref, atol=1e-4, rtol=1e-4), "mismatch vs reference"

    print("KERNEL_OK")
</pallas_src>

<mosaic_0001>
module attributes {stable_mosaic.version = 11 : i64} {
  func.func @encoder_lstm_kernel(%arg0: memref<64x32xf32, #tpu.memory_space<vmem>>, %arg1: memref<32x128xf32, #tpu.memory_space<vmem>>, %arg2: memref<128x128xf32, #tpu.memory_space<vmem>>, %arg3: memref<1x128xf32, #tpu.memory_space<vmem>>, %arg4: memref<128x384xf32, #tpu.memory_space<vmem>>, %arg5: memref<1x128xf32, #tpu.memory_space<vmem>>, %arg6: memref<8x128xf32, #tpu.memory_space<vmem>>, %arg7: memref<80x128xf32, #tpu.memory_space<vmem>>) attributes {dimension_semantics = [], scalar_prefetch = 0 : i64, scratch_operands = 1 : i64, tpu.core_type = #tpu.core_type<tc>} {
    %c0 = arith.constant 0 : index
    %c0_0 = arith.constant 0 : index
    %0 = vector.load %arg0[%c0, %c0_0] : memref<64x32xf32, #tpu.memory_space<vmem>>, vector<64x32xf32>
    %c0_1 = arith.constant 0 : index
    %c0_2 = arith.constant 0 : index
    %1 = vector.load %arg1[%c0_1, %c0_2] : memref<32x128xf32, #tpu.memory_space<vmem>>, vector<32x128xf32>
    %cst = arith.constant dense<0.000000e+00> : vector<64x128xf32>
    %2 = tpu.matmul %0, %1, %cst {dimension_numbers = #tpu.dot_dimension_numbers<[1], [0], [0], [1], [0, 0, 1, 1], [], []>} : vector<64x32xf32>, vector<32x128xf32>, vector<64x128xf32> -> vector<64x128xf32>
    %c0_3 = arith.constant 0 : index
    %c0_4 = arith.constant 0 : index
    %3 = vector.load %arg3[%c0_3, %c0_4] : memref<1x128xf32, #tpu.memory_space<vmem>>, vector<1x128xf32>
    %4 = vector.broadcast %3 : vector<1x128xf32> to vector<64x128xf32>
    %5 = arith.addf %2, %4 : vector<64x128xf32>
    %c8 = arith.constant 8 : index
    %c0_5 = arith.constant 0 : index
    %6 = vector.load %arg7[%c8, %c0_5] : memref<80x128xf32, #tpu.memory_space<vmem>>, vector<64x128xf32>
    tpu.vector_store %arg7[%c8, %c0_5], %5 {strides = array<i32>} : memref<80x128xf32, #tpu.memory_space<vmem>>, vector<64x128xf32>,
    %cst_6 = arith.constant 0.000000e+00 : f32
    %7 = vector.broadcast %cst_6 : f32 to vector<8x128xf32>
    %c0_7 = arith.constant 0 : index
    %c0_8 = arith.constant 0 : index
    %8 = vector.load %arg7[%c0_7, %c0_8] : memref<80x128xf32, #tpu.memory_space<vmem>>, vector<8x128xf32>
    tpu.vector_store %arg7[%c0_7, %c0_8], %7 {strides = array<i32>} : memref<80x128xf32, #tpu.memory_space<vmem>>, vector<8x128xf32>,
    %c72 = arith.constant 72 : index
    %c0_9 = arith.constant 0 : index
    %9 = vector.load %arg7[%c72, %c0_9] : memref<80x128xf32, #tpu.memory_space<vmem>>, vector<8x128xf32>
    tpu.vector_store %arg7[%c72, %c0_9], %7 {strides = array<i32>} : memref<80x128xf32, #tpu.memory_space<vmem>>, vector<8x128xf32>,
    %c8_10 = arith.constant 8 : index
    %c0_11 = arith.constant 0 : index
    %10 = vector.load %arg7[%c8_10, %c0_11] : memref<80x128xf32, #tpu.memory_space<vmem>>, vector<8x128xf32>
    %c0_12 = arith.constant 0 : index
    %c0_13 = arith.constant 0 : index
    %11 = vector.load %arg2[%c0_12, %c0_13] : memref<128x128xf32, #tpu.memory_space<vmem>>, vector<128x128xf32>
    %cst_14 = arith.constant dense<0.000000e+00> : vector<8x128xf32>
    %12 = tpu.matmul %7, %11, %cst_14 {dimension_numbers = #tpu.dot_dimension_numbers<[1], [0], [0], [1], [0, 0, 1, 1], [], []>} : vector<8x128xf32>, vector<128x128xf32>, vector<8x128xf32> -> vector<8x128xf32>
    %13 = arith.addf %10, %12 : vector<8x128xf32>
    %cst_15 = arith.constant 0.000000e+00 : f32
    %14 = vector.broadcast %cst_15 : f32 to vector<8x128xf32>
    %15 = arith.maximumf %13, %14 : vector<8x128xf32>
    %c8_16 = arith.constant 8 : index
    %c0_17 = arith.constant 0 : index
    %16 = vector.load %arg7[%c8_16, %c0_17] : memref<80x128xf32, #tpu.memory_space<vmem>>, vector<8x128xf32>
    tpu.vector_store %arg7[%c8_16, %c0_17], %15 {strides = array<i32>} : memref<80x128xf32, #tpu.memory_space<vmem>>, vector<8x128xf32>,
    %c16 = arith.constant 16 : index
    %c0_18 = arith.constant 0 : index
    %17 = vector.load %arg7[%c16, %c0_18] : memref<80x128xf32, #tpu.memory_space<vmem>>, vector<8x128xf32>
    %c0_19 = arith.constant 0 : index
    %c0_20 = arith.constant 0 : index
    %18 = vector.load %arg2[%c0_19, %c0_20] : memref<128x128xf32, #tpu.memory_space<vmem>>, vector<128x128xf32>
    %cst_21 = arith.constant dense<0.000000e+00> : vector<8x128xf32>
    %19 = tpu.matmul %15, %18, %cst_21 {dimension_numbers = #tpu.dot_dimension_numbers<[1], [0], [0], [1], [0, 0, 1, 1], [], []>} : vector<8x128xf32>, vector<128x128xf32>, vector<8x128xf32> -> vector<8x128xf32>
    %20 = arith.addf %17, %19 : vector<8x128xf32>
    %cst_22 = arith.constant 0.000000e+00 : f32
    %21 = vector.broadcast %cst_22 : f32 to vector<8x128xf32>
    %22 = arith.maximumf %20, %21 : vector<8x128xf32>
    %c16_23 = arith.constant 16 : index
    %c0_24 = arith.constant 0 : index
    %23 = vector.load %arg7[%c16_23, %c0_24] : memref<80x128xf32, #tpu.memory_space<vmem>>, vector<8x128xf32>
    tpu.vector_store %arg7[%c16_23, %c0_24], %22 {strides = array<i32>} : memref<80x128xf32, #tpu.memory_space<vmem>>, vector<8x128xf32>,
    %c24 = arith.constant 24 : index
    %c0_25 = arith.constant 0 : index
    %24 = vector.load %arg7[%c24, %c0_25] : memref<80x128xf32, #tpu.memory_space<vmem>>, vector<8x128xf32>
    %c0_26 = arith.constant 0 : index
    %c0_27 = arith.constant 0 : index
    %25 = vector.load %arg2[%c0_26, %c0_27] : memref<128x128xf32, #tpu.memory_space<vmem>>, vector<128x128xf32>
    %cst_28 = arith.constant dense<0.000000e+00> : vector<8x128xf32>
    %26 = tpu.matmul %22, %25, %cst_28 {dimension_numbers = #tpu.dot_dimension_numbers<[1], [0], [0], [1], [0, 0, 1, 1], [], []>} : vector<8x128xf32>, vector<128x128xf32>, vector<8x128xf32> -> vector<8x128xf32>
    %27 = arith.addf %24, %26 : vector<8x128xf32>
    %cst_29 = arith.constant 0.000000e+00 : f32
    %28 = vector.broadcast %cst_29 : f32 to vector<8x128xf32>
    %29 = arith.maximumf %27, %28 : vector<8x128xf32>
    %c24_30 = arith.constant 24 : index
    %c0_31 = arith.constant 0 : index
    %30 = vector.load %arg7[%c24_30, %c0_31] : memref<80x128xf32, #tpu.memory_space<vmem>>, vector<8x128xf32>
    tpu.vector_store %arg7[%c24_30, %c0_31], %29 {strides = array<i32>} : memref<80x128xf32, #tpu.memory_space<vmem>>, vector<8x128xf32>,
    %c32 = arith.constant 32 : index
    %c0_32 = arith.constant 0 : index
    %31 = vector.load %arg7[%c32, %c0_32] : memref<80x128xf32, #tpu.memory_space<vmem>>, vector<8x128xf32>
    %c0_33 = arith.constant 0 : index
    %c0_34 = arith.constant 0 : index
    %32 = vector.load %arg2[%c0_33, %c0_34] : memref<128x128xf32, #tpu.memory_space<vmem>>, vector<128x128xf32>
    %cst_35 = arith.constant dense<0.000000e+00> : vector<8x128xf32>
    %33 = tpu.matmul %29, %32, %cst_35 {dimension_numbers = #tpu.dot_dimension_numbers<[1], [0], [0], [1], [0, 0, 1, 1], [], []>} : vector<8x128xf32>, vector<128x128xf32>, vector<8x128xf32> -> vector<8x128xf32>
    %34 = arith.addf %31, %33 : vector<8x128xf32>
    %cst_36 = arith.constant 0.000000e+00 : f32
    %35 = vector.broadcast %cst_36 : f32 to vector<8x128xf32>
    %36 = arith.maximumf %34, %35 : vector<8x128xf32>
    %c32_37 = arith.constant 32 : index
    %c0_38 = arith.constant 0 : index
    %37 = vector.load %arg7[%c32_37, %c0_38] : memref<80x128xf32, #tpu.memory_space<vmem>>, vector<8x128xf32>
    tpu.vector_store %arg7[%c32_37, %c0_38], %36 {strides = array<i32>} : memref<80x128xf32, #tpu.memory_space<vmem>>, vector<8x128xf32>,
    %c40 = arith.constant 40 : index
    %c0_39 = arith.constant 0 : index
    %38 = vector.load %arg7[%c40, %c0_39] : memref<80x128xf32, #tpu.memory_space<vmem>>, vector<8x128xf32>
    %c0_40 = arith.constant 0 : index
    %c0_41 = arith.constant 0 : index
    %39 = vector.load %arg2[%c0_40, %c0_41] : memref<128x128xf32, #tpu.memory_space<vmem>>, vector<128x128xf32>
    %cst_42 = arith.constant dense<0.000000e+00> : vector<8x128xf32>
    %40 = tpu.matmul %36, %39, %cst_42 {dimension_numbers = #tpu.dot_dimension_numbers<[1], [0], [0], [1], [0, 0, 1, 1], [], []>} : vector<8x128xf32>, vector<128x128xf32>, vector<8x128xf32> -> vector<8x128xf32>
    %41 = arith.addf %38, %40 : vector<8x128xf32>
    %cst_43 = arith.constant 0.000000e+00 : f32
    %42 = vector.broadcast %cst_43 : f32 to vector<8x128xf32>
    %43 = arith.maximumf %41, %42 : vector<8x128xf32>
    %c40_44 = arith.constant 40 : index
    %c0_45 = arith.constant 0 : index
    %44 = vector.load %arg7[%c40_44, %c0_45] : memref<80x128xf32, #tpu.memory_space<vmem>>, vector<8x128xf32>
    tpu.vector_store %arg7[%c40_44, %c0_45], %43 {strides = array<i32>} : memref<80x128xf32, #tpu.memory_space<vmem>>, vector<8x128xf32>,
    %c48 = arith.constant 48 : index
    %c0_46 = arith.constant 0 : index
    %45 = vector.load %arg7[%c48, %c0_46] : memref<80x128xf32, #tpu.memory_space<vmem>>, vector<8x128xf32>
    %c0_47 = arith.constant 0 : index
    %c0_48 = arith.constant 0 : index
    %46 = vector.load %arg2[%c0_47, %c0_48] : memref<128x128xf32, #tpu.memory_space<vmem>>, vector<128x128xf32>
    %cst_49 = arith.constant dense<0.000000e+00> : vector<8x128xf32>
    %47 = tpu.matmul %43, %46, %cst_49 {dimension_numbers = #tpu.dot_dimension_numbers<[1], [0], [0], [1], [0, 0, 1, 1], [], []>} : vector<8x128xf32>, vector<128x128xf32>, vector<8x128xf32> -> vector<8x128xf32>
    %48 = arith.addf %45, %47 : vector<8x128xf32>
    %cst_50 = arith.constant 0.000000e+00 : f32
    %49 = vector.broadcast %cst_50 : f32 to vector<8x128xf32>
    %50 = arith.maximumf %48, %49 : vector<8x128xf32>
    %c48_51 = arith.constant 48 : index
    %c0_52 = arith.constant 0 : index
    %51 = vector.load %arg7[%c48_51, %c0_52] : memref<80x128xf32, #tpu.memory_space<vmem>>, vector<8x128xf32>
    tpu.vector_store %arg7[%c48_51, %c0_52], %50 {strides = array<i32>} : memref<80x128xf32, #tpu.memory_space<vmem>>, vector<8x128xf32>,
    %c56 = arith.constant 56 : index
    %c0_53 = arith.constant 0 : index
    %52 = vector.load %arg7[%c56, %c0_53] : memref<80x128xf32, #tpu.memory_space<vmem>>, vector<8x128xf32>
    %c0_54 = arith.constant 0 : index
    %c0_55 = arith.constant 0 : index
    %53 = vector.load %arg2[%c0_54, %c0_55] : memref<128x128xf32, #tpu.memory_space<vmem>>, vector<128x128xf32>
    %cst_56 = arith.constant dense<0.000000e+00> : vector<8x128xf32>
    %54 = tpu.matmul %50, %53, %cst_56 {dimension_numbers = #tpu.dot_dimension_numbers<[1], [0], [0], [1], [0, 0, 1, 1], [], []>} : vector<8x128xf32>, vector<128x128xf32>, vector<8x128xf32> -> vector<8x128xf32>
    %55 = arith.addf %52, %54 : vector<8x128xf32>
    %cst_57 = arith.constant 0.000000e+00 : f32
    %56 = vector.broadcast %cst_57 : f32 to vector<8x128xf32>
    %57 = arith.maximumf %55, %56 : vector<8x128xf32>
    %c56_58 = arith.constant 56 : index
    %c0_59 = arith.constant 0 : index
    %58 = vector.load %arg7[%c56_58, %c0_59] : memref<80x128xf32, #tpu.memory_space<vmem>>, vector<8x128xf32>
    tpu.vector_store %arg7[%c56_58, %c0_59], %57 {strides = array<i32>} : memref<80x128xf32, #tpu.memory_space<vmem>>, vector<8x128xf32>,
    %c64 = arith.constant 64 : index
    %c0_60 = arith.constant 0 : index
    %59 = vector.load %arg7[%c64, %c0_60] : memref<80x128xf32, #tpu.memory_space<vmem>>, vector<8x128xf32>
    %c0_61 = arith.constant 0 : index
    %c0_62 = arith.constant 0 : index
    %60 = vector.load %arg2[%c0_61, %c0_62] : memref<128x128xf32, #tpu.memory_space<vmem>>, vector<128x128xf32>
    %cst_63 = arith.constant dense<0.000000e+00> : vector<8x128xf32>
    %61 = tpu.matmul %57, %60, %cst_63 {dimension_numbers = #tpu.dot_dimension_numbers<[1], [0], [0], [1], [0, 0, 1, 1], [], []>} : vector<8x128xf32>, vector<128x128xf32>, vector<8x128xf32> -> vector<8x128xf32>
    %62 = arith.addf %59, %61 : vector<8x128xf32>
    %cst_64 = arith.constant 0.000000e+00 : f32
    %63 = vector.broadcast %cst_64 : f32 to vector<8x128xf32>
    %64 = arith.maximumf %62, %63 : vector<8x128xf32>
    %c64_65 = arith.constant 64 : index
    %c0_66 = arith.constant 0 : index
    %65 = vector.load %arg7[%c64_65, %c0_66] : memref<80x128xf32, #tpu.memory_space<vmem>>, vector<8x128xf32>
    tpu.vector_store %arg7[%c64_65, %c0_66], %64 {strides = array<i32>} : memref<80x128xf32, #tpu.memory_space<vmem>>, vector<8x128xf32>,
    %c0_67 = arith.constant 0 : index
    %c0_68 = arith.constant 0 : index
    %66 = vector.load %arg7[%c0_67, %c0_68] : memref<80x128xf32, #tpu.memory_space<vmem>>, vector<80x128xf32>
    %c0_69 = arith.constant 0 : index
    %c0_70 = arith.constant 0 : index
    %67 = vector.load %arg4[%c0_69, %c0_70] : memref<128x384xf32, #tpu.memory_space<vmem>>, vector<128x384xf32>
    %cst_71 = arith.constant dense<0.000000e+00> : vector<80x384xf32>
    %68 = tpu.matmul %66, %67, %cst_71 {dimension_numbers = #tpu.dot_dimension_numbers<[1], [0], [0], [1], [0, 0, 1, 1], [], []>} : vector<80x128xf32>, vector<128x384xf32>, vector<80x384xf32> -> vector<80x384xf32>
    %69 = vector.extract_strided_slice %68 {offsets = [0, 0], sizes = [64, 128], strides = [1, 1]} : vector<80x384xf32> to vector<64x128xf32>
    %70 = vector.extract_strided_slice %68 {offsets = [8, 128], sizes = [64, 128], strides = [1, 1]} : vector<80x384xf32> to vector<64x128xf32>
    %71 = vector.extract_strided_slice %68 {offsets = [16, 256], sizes = [64, 128], strides = [1, 1]} : vector<80x384xf32> to vector<64x128xf32>
    %72 = arith.addf %69, %70 : vector<64x128xf32>
    %73 = arith.addf %72, %71 : vector<64x128xf32>
    %c0_72 = arith.constant 0 : index
    %c0_73 = arith.constant 0 : index
    %74 = vector.load %arg5[%c0_72, %c0_73] : memref<1x128xf32, #tpu.memory_space<vmem>>, vector<1x128xf32>
    %75 = vector.broadcast %74 : vector<1x128xf32> to vector<64x128xf32>
    %76 = arith.addf %73, %75 : vector<64x128xf32>
    %cst_74 = arith.constant 0.000000e+00 : f32
    %77 = vector.broadcast %cst_74 : f32 to vector<64x128xf32>
    %78 = arith.maximumf %76, %77 : vector<64x128xf32>
    %79 = vector.shape_cast %78 : vector<64x128xf32> to vector<8x8x128xf32>
    %cst_75 = arith.constant dense<0xFF800000> : vector<8x128xf32>
    %80 = vector.multi_reduction <maximumf>, %79, %cst_75 [0] : vector<8x8x128xf32> to vector<8x128xf32>
    %c0_76 = arith.constant 0 : index
    %c0_77 = arith.constant 0 : index
    %81 = vector.load %arg6[%c0_76, %c0_77] : memref<8x128xf32, #tpu.memory_space<vmem>>, vector<8x128xf32>
    tpu.vector_store %arg6[%c0_76, %c0_77], %80 {strides = array<i32>} : memref<8x128xf32, #tpu.memory_space<vmem>>, vector<8x128xf32>,
    return
  }
}

</mosaic_0001>

<llo_original>
// kernel: encoder_lstm_apply.1
$region0: #{encoder_lstm_apply.1}
  #allocation0 [shape = 'u32[]', space=smem, size = 0x4, offset = 0x4, fixed_abs, tag = 'smem constant byte address 0x4 - core index']
  #allocation1 [shape = 'u32[72,128]{1,0:T(1,128)}', space=vmem, size = 0x9000, scoped, tag = 'internal scratch']
  #allocation2 [shape = 'f32[80,128]{1,0:T(8,128)}', space=vmem, size = 0xa000, scoped, tag = 'scratch operand']
  %s0 = inlined_call_operand.vmem [shape: f32[64,32], index: 0, kind: input, shape index: {}]
  %s1 = inlined_call_operand.vmem [shape: f32[32,128], index: 1, kind: input, shape index: {}]
  %s2 = inlined_call_operand.hbm [shape: f32[128,128], index: 2, kind: input, shape index: {}]
  %s3 = inlined_call_operand.vmem [shape: f32[1,128], index: 3, kind: input, shape index: {}]
  %s4 = inlined_call_operand.hbm [shape: f32[128,384], index: 4, kind: input, shape index: {}]
  %s5 = inlined_call_operand.vmem [shape: f32[1,128], index: 5, kind: input, shape index: {}]
  %s6 = inlined_call_operand.vmem [shape: f32[8,128], index: 6, kind: output, shape index: {}]
  %s7 = sld [smem:[#allocation0]]
  $region42: #{encoder_lstm_apply.1} parent=0
    _
  %s9 = ssub.s32 1, %s7
  %s10 = scalar_select 0, %s9, %s7
  $region1: #{encoder_lstm_apply.1} parent=0
    #allocation3 [shape = 'u8[65536]{0}', space=vmem, size = 0x10000, scoped, tag = 'input window, operand 2, single buffered']
    #allocation4 [shape = 's32[1]{0}', space=sflag, size = 0x4, scoped, tag = 'scoped memory for encoder_lstm_apply.1']
    #allocation5 [shape = 'u8[196608]{0}', space=vmem, size = 0x30000, scoped, tag = 'input window, operand 4, single buffered']
    #allocation6 [shape = 's32[1]{0}', space=sflag, size = 0x4, scoped, tag = 'scoped memory for encoder_lstm_apply.1']
    %11 = vsyncpa [#allocation4], 0
    %12 = vsyncpa [#allocation6], 0
    // Predicated region
    $region2: #{encoder_lstm_apply.1} parent=1 // pred_check
      _
    $region3: #{encoder_lstm_apply.1} parent=1 // pred_check_branch
      %14 = sbr.rel (0) target = $region5
    $region4: #{encoder_lstm_apply.1} parent=1 // pred_region
      _
    $region5: #{encoder_lstm_apply.1} parent=1 // pred_fallthru
      _
    // Predicated region
    $region6: #{encoder_lstm_apply.1} parent=1 // pred_check
      _
    $region7: #{encoder_lstm_apply.1} parent=1 // pred_check_branch
      %16 = sbr.rel (0) target = $region9
    $region8: #{encoder_lstm_apply.1} parent=1 // pred_region
      _
    $region9: #{encoder_lstm_apply.1} parent=1 // pred_fallthru
      _
    // Predicated region
    $region10: #{encoder_lstm_apply.1} parent=1 // pred_check
      _
    $region11: #{encoder_lstm_apply.1} parent=1 // pred_check_branch
      %18 = sbr.rel (0) target = $region13
    $region12: #{encoder_lstm_apply.1} parent=1 // pred_region
      %20 = vsyncadd [#allocation4], 0
      %s21 = sshll.u32 %s2, 4
      %s22 = int_to_ptr.hbm [resolvable:$true] %s21
      %s23 = sshll.u32 [#allocation3], 4
      %s24 = int_to_ptr.vmem [resolvable:$true] %s23
      %29 = dma.hbm_to_vmem [thread:$0]  %s22, 2048, %s24, [#allocation4], 128, 128, 8
    $region13: #{encoder_lstm_apply.1} parent=1 // pred_fallthru
      _
    // Predicated region
    $region14: #{encoder_lstm_apply.1} parent=1 // pred_check
      _
    $region15: #{encoder_lstm_apply.1} parent=1 // pred_check_branch
      %31 = sbr.rel (0) target = $region17
    $region16: #{encoder_lstm_apply.1} parent=1 // pred_region
      _
    $region17: #{encoder_lstm_apply.1} parent=1 // pred_fallthru
      _
    // Predicated region
    $region18: #{encoder_lstm_apply.1} parent=1 // pred_check
      _
    $region19: #{encoder_lstm_apply.1} parent=1 // pred_check_branch
      %33 = sbr.rel (0) target = $region21
    $region20: #{encoder_lstm_apply.1} parent=1 // pred_region
      %35 = vsyncadd [#allocation6], 0
      %s36 = sshll.u32 %s4, 4
      %s37 = int_to_ptr.hbm [resolvable:$true] %s36
      %s38 = sshll.u32 [#allocation5], 4
      %s39 = int_to_ptr.vmem [resolvable:$true] %s38
      %44 = dma.hbm_to_vmem [thread:$0]  %s37, 6144, %s39, [#allocation6], 384, 384, 24
    $region21: #{encoder_lstm_apply.1} parent=1 // pred_fallthru
      _
    // Predicated region
    $region22: #{encoder_lstm_apply.1} parent=1 // pred_check
      _
    $region23: #{encoder_lstm_apply.1} parent=1 // pred_check_branch
      %46 = sbr.rel (0) target = $region25
    $region24: #{encoder_lstm_apply.1} parent=1 // pred_region
      _
    $region25: #{encoder_lstm_apply.1} parent=1 // pred_fallthru
      _
    // Predicated region
    $region26: #{encoder_lstm_apply.1} parent=1 // pred_check
      _
    $region27: #{encoder_lstm_apply.1} parent=1 // pred_check_branch
      %48 = sbr.rel (0) target = $region29
    $region28: #{encoder_lstm_apply.1} parent=1 // pred_region
      %50 = dma.done [#allocation4], 2048
    $region29: #{encoder_lstm_apply.1} parent=1 // pred_fallthru
      _
    // Predicated region
    $region30: #{encoder_lstm_apply.1} parent=1 // pred_check
      _
    $region31: #{encoder_lstm_apply.1} parent=1 // pred_check_branch
      %52 = sbr.rel (0) target = $region33
    $region32: #{encoder_lstm_apply.1} parent=1 // pred_region
      %54 = dma.done [#allocation6], 6144
    $region33: #{encoder_lstm_apply.1} parent=1 // pred_fallthru
      _
    %v55 = vld [vmem:[%s0] sm:$0xff]
    %v56 = vld [vmem:[%s0 + $0x8] sm:$0xff]
    %v57 = vld [vmem:[%s0 + $0x10] sm:$0xff]
    %v58 = vld [vmem:[%s0 + $0x18] sm:$0xff]
    %v59 = vld [vmem:[%s0 + $0x20] sm:$0xff]
    %v60 = vld [vmem:[%s0 + $0x28] sm:$0xff]
    %v61 = vld [vmem:[%s0 + $0x30] sm:$0xff]
    %v62 = vld [vmem:[%s0 + $0x38] sm:$0xff]
    %v63 = vld [vmem:[%s1] sm:$0xff]
    %v64 = vld [vmem:[%s1 + $0x8] sm:$0xff]
    %v65 = vld [vmem:[%s1 + $0x10] sm:$0xff]
    %v66 = vld [vmem:[%s1 + $0x18] sm:$0xff]
    %v67 = vld [vmem:[%s3] sm:$0x1]
    %v69 = vperm.slane %v67, 0
    %vm71 = vcmask 261120
    %v73 = vsel %vm71, %v55, 0
    %v76 = vsel %vm71, %v56, 0
    %v79 = vsel %vm71, %v57, 0
    %v82 = vsel %vm71, %v58, 0
    %v85 = vsel %vm71, %v59, 0
    %v88 = vsel %vm71, %v60, 0
    %v91 = vsel %vm71, %v61, 0
    %v94 = vsel %vm71, %v62, 0
    %96 = vmatpush.msra.mxu0 0.0
    %97 = vmatpush.msra.mxu0 0.0
    %98 = vmatpush.msra.mxu0 0.0
    %99 = vmatpush.msra.mxu0 0.0
    %100 = vmatpush.msra.mxu0 0.0
    %101 = vmatpush.msra.mxu0 0.0
    %102 = vmatpush.msra.mxu0 0.0
    %103 = vmatpush.msra.mxu0 0.0
    %104 = vmatpush.msra.mxu0 0.0
    %105 = vmatpush.msra.mxu0 0.0
    %106 = vmatpush.msra.mxu0 0.0
    %107 = vmatpush.msra.mxu0 0.0
    %108 = vmatpush.msra.mxu0 %v66
    %109 = vmatpush.msra.mxu0 %v65
    %110 = vmatpush.msra.mxu0 %v64
    %111 = vmatpush.msra.mxu0 %v63
    %112 = vmatmul.f32.gmra.mxu0 %v73
    %v113 = vpop.f32.mrf.mxu0
    %v114 = vadd.f32 %v69, %v113
    %115 = vmatmul.f32.gmra.mxu0 %v76
    %v116 = vpop.f32.mrf.mxu0
    %v117 = vadd.f32 %v69, %v116
    %118 = vmatmul.f32.gmra.mxu0 %v79
    %v119 = vpop.f32.mrf.mxu0
    %v120 = vadd.f32 %v69, %v119
    %121 = vmatmul.f32.gmra.mxu0 %v82
    %v122 = vpop.f32.mrf.mxu0
    %v123 = vadd.f32 %v69, %v122
    %124 = vmatmul.f32.gmra.mxu0 %v85
    %v125 = vpop.f32.mrf.mxu0
    %v126 = vadd.f32 %v69, %v125
    %127 = vmatmul.f32.gmra.mxu0 %v88
    %v128 = vpop.f32.mrf.mxu0
    %v129 = vadd.f32 %v69, %v128
    %130 = vmatmul.f32.gmra.mxu0 %v91
    %v131 = vpop.f32.mrf.mxu0
    %v132 = vadd.f32 %v69, %v131
    %133 = vmatmul.f32.gmra.mxu0 %v94
    %v134 = vpop.f32.mrf.mxu0
    %v135 = vadd.f32 %v69, %v134
    %136 = vdwg.mxu0
    %137 = vst [vmem:[#allocation2 + $0x8] sm:$0xff] %v114
    %138 = vst [vmem:[#allocation2 + $0x10] sm:$0xff] %v117
    %139 = vst [vmem:[#allocation2 + $0x18] sm:$0xff] %v120
    %140 = vst [vmem:[#allocation2 + $0x20] sm:$0xff] %v123
    %141 = vst [vmem:[#allocation2 + $0x28] sm:$0xff] %v126
    %142 = vst [vmem:[#allocation2 + $0x30] sm:$0xff] %v129
    %143 = vst [vmem:[#allocation2 + $0x38] sm:$0xff] %v132
    %144 = vst [vmem:[#allocation2 + $0x40] sm:$0xff] %v135
    %145 = vst [vmem:[#allocation2] sm:$0xff] 0.0
    %146 = vst [vmem:[#allocation2 + $0x48] sm:$0xff] 0.0
    %v147 = vld [vmem:[#allocation2 + $0x8] sm:$0xff]
    %v148 = vld [vmem:[#allocation3] sm:$0xff]
    %v149 = vld [vmem:[#allocation3 + $0x8] sm:$0xff]
    %v150 = vld [vmem:[#allocation3 + $0x10] sm:$0xff]
    %v151 = vld [vmem:[#allocation3 + $0x18] sm:$0xff]
    %v152 = vld [vmem:[#allocation3 + $0x20] sm:$0xff]
    %v153 = vld [vmem:[#allocation3 + $0x28] sm:$0xff]
    %v154 = vld [vmem:[#allocation3 + $0x30] sm:$0xff]
    %v155 = vld [vmem:[#allocation3 + $0x38] sm:$0xff]
    %v156 = vld [vmem:[#allocation3 + $0x40] sm:$0xff]
    %v157 = vld [vmem:[#allocation3 + $0x48] sm:$0xff]
    %v158 = vld [vmem:[#allocation3 + $0x50] sm:$0xff]
    %v159 = vld [vmem:[#allocation3 + $0x58] sm:$0xff]
    %v160 = vld [vmem:[#allocation3 + $0x60] sm:$0xff]
    %v161 = vld [vmem:[#allocation3 + $0x68] sm:$0xff]
    %v162 = vld [vmem:[#allocation3 + $0x70] sm:$0xff]
    %v163 = vld [vmem:[#allocation3 + $0x78] sm:$0xff]
    %164 = vmatpush.msra.mxu0 %v163
    %165 = vmatpush.msra.mxu0 %v162
    %166 = vmatpush.msra.mxu0 %v161
    %167 = vmatpush.msra.mxu0 %v160
    %168 = vmatpush.msra.mxu0 %v159
    %169 = vmatpush.msra.mxu0 %v158
    %170 = vmatpush.msra.mxu0 %v157
    %171 = vmatpush.msra.mxu0 %v156
    %172 = vmatpush.msra.mxu0 %v155
    %173 = vmatpush.msra.mxu0 %v154
    %174 = vmatpush.msra.mxu0 %v153
    %175 = vmatpush.msra.mxu0 %v152
    %176 = vmatpush.msra.mxu0 %v151
    %177 = vmatpush.msra.mxu0 %v150
    %178 = vmatpush.msra.mxu0 %v149
    %179 = vmatpush.msra.mxu0 %v148
    %180 = vmatmul.f32.gmra.mxu0 0.0
    %v181 = vpop.f32.mrf.mxu0
    %v182 = vadd.f32 0.0, %v181
    %183 = vdwg.mxu0
    %v184 = vadd.f32 %v147, %v182
    %v185 = vmax.f32 %v184, 0.0
    %186 = vst [vmem:[#allocation2 + $0x8] sm:$0xff] %v185
    %v187 = vld [vmem:[#allocation2 + $0x10] sm:$0xff]
    %v188 = vld [vmem:[#allocation3] sm:$0xff]
    %v189 = vld [vmem:[#allocation3 + $0x8] sm:$0xff]
    %v190 = vld [vmem:[#allocation3 + $0x10] sm:$0xff]
    %v191 = vld [vmem:[#allocation3 + $0x18] sm:$0xff]
    %v192 = vld [vmem:[#allocation3 + $0x20] sm:$0xff]
    %v193 = vld [vmem:[#allocation3 + $0x28] sm:$0xff]
    %v194 = vld [vmem:[#allocation3 + $0x30] sm:$0xff]
    %v195 = vld [vmem:[#allocation3 + $0x38] sm:$0xff]
    %v196 = vld [vmem:[#allocation3 + $0x40] sm:$0xff]
    %v197 = vld [vmem:[#allocation3 + $0x48] sm:$0xff]
    %v198 = vld [vmem:[#allocation3 + $0x50] sm:$0xff]
    %v199 = vld [vmem:[#allocation3 + $0x58] sm:$0xff]
    %v200 = vld [vmem:[#allocation3 + $0x60] sm:$0xff]
    %v201 = vld [vmem:[#allocation3 + $0x68] sm:$0xff]
    %v202 = vld [vmem:[#allocation3 + $0x70] sm:$0xff]
    %v203 = vld [vmem:[#allocation3 + $0x78] sm:$0xff]
    %204 = vmatpush.msra.mxu0 %v203
    %205 = vmatpush.msra.mxu0 %v202
    %206 = vmatpush.msra.mxu0 %v201
    %207 = vmatpush.msra.mxu0 %v200
    %208 = vmatpush.msra.mxu0 %v199
    %209 = vmatpush.msra.mxu0 %v198
    %210 = vmatpush.msra.mxu0 %v197
    %211 = vmatpush.msra.mxu0 %v196
    %212 = vmatpush.msra.mxu0 %v195
    %213 = vmatpush.msra.mxu0 %v194
    %214 = vmatpush.msra.mxu0 %v193
    %215 = vmatpush.msra.mxu0 %v192
    %216 = vmatpush.msra.mxu0 %v191
    %217 = vmatpush.msra.mxu0 %v190
    %218 = vmatpush.msra.mxu0 %v189
    %219 = vmatpush.msra.mxu0 %v188
    %220 = vmatmul.f32.gmra.mxu0 %v185
    %v221 = vpop.f32.mrf.mxu0
    %v222 = vadd.f32 0.0, %v221
    %223 = vdwg.mxu0
    %v224 = vadd.f32 %v187, %v222
    %v225 = vmax.f32 %v224, 0.0
    %226 = vst [vmem:[#allocation2 + $0x10] sm:$0xff] %v225
    %v227 = vld [vmem:[#allocation2 + $0x18] sm:$0xff]
    %v228 = vld [vmem:[#allocation3] sm:$0xff]
    %v229 = vld [vmem:[#allocation3 + $0x8] sm:$0xff]
    %v230 = vld [vmem:[#allocation3 + $0x10] sm:$0xff]
    %v231 = vld [vmem:[#allocation3 + $0x18] sm:$0xff]
    %v232 = vld [vmem:[#allocation3 + $0x20] sm:$0xff]
    %v233 = vld [vmem:[#allocation3 + $0x28] sm:$0xff]
    %v234 = vld [vmem:[#allocation3 + $0x30] sm:$0xff]
    %v235 = vld [vmem:[#allocation3 + $0x38] sm:$0xff]
    %v236 = vld [vmem:[#allocation3 + $0x40] sm:$0xff]
    %v237 = vld [vmem:[#allocation3 + $0x48] sm:$0xff]
    %v238 = vld [vmem:[#allocation3 + $0x50] sm:$0xff]
    %v239 = vld [vmem:[#allocation3 + $0x58] sm:$0xff]
    %v240 = vld [vmem:[#allocation3 + $0x60] sm:$0xff]
    %v241 = vld [vmem:[#allocation3 + $0x68] sm:$0xff]
    %v242 = vld [vmem:[#allocation3 + $0x70] sm:$0xff]
    %v243 = vld [vmem:[#allocation3 + $0x78] sm:$0xff]
    %244 = vmatpush.msra.mxu0 %v243
    %245 = vmatpush.msra.mxu0 %v242
    %246 = vmatpush.msra.mxu0 %v241
    %247 = vmatpush.msra.mxu0 %v240
    %248 = vmatpush.msra.mxu0 %v239
    %249 = vmatpush.msra.mxu0 %v238
    %250 = vmatpush.msra.mxu0 %v237
    %251 = vmatpush.msra.mxu0 %v236
    %252 = vmatpush.msra.mxu0 %v235
    %253 = vmatpush.msra.mxu0 %v234
    %254 = vmatpush.msra.mxu0 %v233
    %255 = vmatpush.msra.mxu0 %v232
    %256 = vmatpush.msra.mxu0 %v231
    %257 = vmatpush.msra.mxu0 %v230
    %258 = vmatpush.msra.mxu0 %v229
    %259 = vmatpush.msra.mxu0 %v228
    %260 = vmatmul.f32.gmra.mxu0 %v225
    %v261 = vpop.f32.mrf.mxu0
    %v262 = vadd.f32 0.0, %v261
    %263 = vdwg.mxu0
    %v264 = vadd.f32 %v227, %v262
    %v265 = vmax.f32 %v264, 0.0
    %266 = vst [vmem:[#allocation2 + $0x18] sm:$0xff] %v265
    %v267 = vld [vmem:[#allocation2 + $0x20] sm:$0xff]
    %v268 = vld [vmem:[#allocation3] sm:$0xff]
    %v269 = vld [vmem:[#allocation3 + $0x8] sm:$0xff]
    %v270 = vld [vmem:[#allocation3 + $0x10] sm:$0xff]
    %v271 = vld [vmem:[#allocation3 + $0x18] sm:$0xff]
    %v272 = vld [vmem:[#allocation3 + $0x20] sm:$0xff]
    %v273 = vld [vmem:[#allocation3 + $0x28] sm:$0xff]
    %v274 = vld [vmem:[#allocation3 + $0x30] sm:$0xff]
    %v275 = vld [vmem:[#allocation3 + $0x38] sm:$0xff]
    %v276 = vld [vmem:[#allocation3 + $0x40] sm:$0xff]
    %v277 = vld [vmem:[#allocation3 + $0x48] sm:$0xff]
    %v278 = vld [vmem:[#allocation3 + $0x50] sm:$0xff]
    %v279 = vld [vmem:[#allocation3 + $0x58] sm:$0xff]
    %v280 = vld [vmem:[#allocation3 + $0x60] sm:$0xff]
    %v281 = vld [vmem:[#allocation3 + $0x68] sm:$0xff]
    %v282 = vld [vmem:[#allocation3 + $0x70] sm:$0xff]
    %v283 = vld [vmem:[#allocation3 + $0x78] sm:$0xff]
    %284 = vmatpush.msra.mxu0 %v283
    %285 = vmatpush.msra.mxu0 %v282
    %286 = vmatpush.msra.mxu0 %v281
    %287 = vmatpush.msra.mxu0 %v280
    %288 = vmatpush.msra.mxu0 %v279
    %289 = vmatpush.msra.mxu0 %v278
    %290 = vmatpush.msra.mxu0 %v277
    %291 = vmatpush.msra.mxu0 %v276
    %292 = vmatpush.msra.mxu0 %v275
    %293 = vmatpush.msra.mxu0 %v274
    %294 = vmatpush.msra.mxu0 %v273
    %295 = vmatpush.msra.mxu0 %v272
    %296 = vmatpush.msra.mxu0 %v271
    %297 = vmatpush.msra.mxu0 %v270
    %298 = vmatpush.msra.mxu0 %v269
    %299 = vmatpush.msra.mxu0 %v268
    %300 = vmatmul.f32.gmra.mxu0 %v265
    %v301 = vpop.f32.mrf.mxu0
    %v302 = vadd.f32 0.0, %v301
    %303 = vdwg.mxu0
    %v304 = vadd.f32 %v267, %v302
    %v305 = vmax.f32 %v304, 0.0
    %306 = vst [vmem:[#allocation2 + $0x20] sm:$0xff] %v305
    %v307 = vld [vmem:[#allocation2 + $0x28] sm:$0xff]
    %v308 = vld [vmem:[#allocation3] sm:$0xff]
    %v309 = vld [vmem:[#allocation3 + $0x8] sm:$0xff]
    %v310 = vld [vmem:[#allocation3 + $0x10] sm:$0xff]
    %v311 = vld [vmem:[#allocation3 + $0x18] sm:$0xff]
    %v312 = vld [vmem:[#allocation3 + $0x20] sm:$0xff]
    %v313 = vld [vmem:[#allocation3 + $0x28] sm:$0xff]
    %v314 = vld [vmem:[#allocation3 + $0x30] sm:$0xff]
    %v315 = vld [vmem:[#allocation3 + $0x38] sm:$0xff]
    %v316 = vld [vmem:[#allocation3 + $0x40] sm:$0xff]
    %v317 = vld [vmem:[#allocation3 + $0x48] sm:$0xff]
    %v318 = vld [vmem:[#allocation3 + $0x50] sm:$0xff]
    %v319 = vld [vmem:[#allocation3 + $0x58] sm:$0xff]
    %v320 = vld [vmem:[#allocation3 + $0x60] sm:$0xff]
    %v321 = vld [vmem:[#allocation3 + $0x68] sm:$0xff]
    %v322 = vld [vmem:[#allocation3 + $0x70] sm:$0xff]
    %v323 = vld [vmem:[#allocation3 + $0x78] sm:$0xff]
    %324 = vmatpush.msra.mxu0 %v323
    %325 = vmatpush.msra.mxu0 %v322
    %326 = vmatpush.msra.mxu0 %v321
    %327 = vmatpush.msra.mxu0 %v320
    %328 = vmatpush.msra.mxu0 %v319
    %329 = vmatpush.msra.mxu0 %v318
    %330 = vmatpush.msra.mxu0 %v317
    %331 = vmatpush.msra.mxu0 %v316
    %332 = vmatpush.msra.mxu0 %v315
    %333 = vmatpush.msra.mxu0 %v314
    %334 = vmatpush.msra.mxu0 %v313
    %335 = vmatpush.msra.mxu0 %v312
    %336 = vmatpush.msra.mxu0 %v311
    %337 = vmatpush.msra.mxu0 %v310
    %338 = vmatpush.msra.mxu0 %v309
    %339 = vmatpush.msra.mxu0 %v308
    %340 = vmatmul.f32.gmra.mxu0 %v305
    %v341 = vpop.f32.mrf.mxu0
    %v342 = vadd.f32 0.0, %v341
    %343 = vdwg.mxu0
    %v344 = vadd.f32 %v307, %v342
    %v345 = vmax.f32 %v344, 0.0
    %346 = vst [vmem:[#allocation2 + $0x28] sm:$0xff] %v345
    %v347 = vld [vmem:[#allocation2 + $0x30] sm:$0xff]
    %v348 = vld [vmem:[#allocation3] sm:$0xff]
    %v349 = vld [vmem:[#allocation3 + $0x8] sm:$0xff]
    %v350 = vld [vmem:[#allocation3 + $0x10] sm:$0xff]
    %v351 = vld [vmem:[#allocation3 + $0x18] sm:$0xff]
    %v352 = vld [vmem:[#allocation3 + $0x20] sm:$0xff]
    %v353 = vld [vmem:[#allocation3 + $0x28] sm:$0xff]
    %v354 = vld [vmem:[#allocation3 + $0x30] sm:$0xff]
    %v355 = vld [vmem:[#allocation3 + $0x38] sm:$0xff]
    %v356 = vld [vmem:[#allocation3 + $0x40] sm:$0xff]
    %v357 = vld [vmem:[#allocation3 + $0x48] sm:$0xff]
    %v358 = vld [vmem:[#allocation3 + $0x50] sm:$0xff]
    %v359 = vld [vmem:[#allocation3 + $0x58] sm:$0xff]
    %v360 = vld [vmem:[#allocation3 + $0x60] sm:$0xff]
    %v361 = vld [vmem:[#allocation3 + $0x68] sm:$0xff]
    %v362 = vld [vmem:[#allocation3 + $0x70] sm:$0xff]
    %v363 = vld [vmem:[#allocation3 + $0x78] sm:$0xff]
    %364 = vmatpush.msra.mxu0 %v363
    %365 = vmatpush.msra.mxu0 %v362
    %366 = vmatpush.msra.mxu0 %v361
    %367 = vmatpush.msra.mxu0 %v360
    %368 = vmatpush.msra.mxu0 %v359
    %369 = vmatpush.msra.mxu0 %v358
    %370 = vmatpush.msra.mxu0 %v357
    %371 = vmatpush.msra.mxu0 %v356
    %372 = vmatpush.msra.mxu0 %v355
    %373 = vmatpush.msra.mxu0 %v354
    %374 = vmatpush.msra.mxu0 %v353
    %375 = vmatpush.msra.mxu0 %v352
    %376 = vmatpush.msra.mxu0 %v351
    %377 = vmatpush.msra.mxu0 %v350
    %378 = vmatpush.msra.mxu0 %v349
    %379 = vmatpush.msra.mxu0 %v348
    %380 = vmatmul.f32.gmra.mxu0 %v345
    %v381 = vpop.f32.mrf.mxu0
    %v382 = vadd.f32 0.0, %v381
    %383 = vdwg.mxu0
    %v384 = vadd.f32 %v347, %v382
    %v385 = vmax.f32 %v384, 0.0
    %386 = vst [vmem:[#allocation2 + $0x30] sm:$0xff] %v385
    %v387 = vld [vmem:[#allocation2 + $0x38] sm:$0xff]
    %v388 = vld [vmem:[#allocation3] sm:$0xff]
    %v389 = vld [vmem:[#allocation3 + $0x8] sm:$0xff]
    %v390 = vld [vmem:[#allocation3 + $0x10] sm:$0xff]
    %v391 = vld [vmem:[#allocation3 + $0x18] sm:$0xff]
    %v392 = vld [vmem:[#allocation3 + $0x20] sm:$0xff]
    %v393 = vld [vmem:[#allocation3 + $0x28] sm:$0xff]
    %v394 = vld [vmem:[#allocation3 + $0x30] sm:$0xff]
    %v395 = vld [vmem:[#allocation3 + $0x38] sm:$0xff]
    %v396 = vld [vmem:[#allocation3 + $0x40] sm:$0xff]
    %v397 = vld [vmem:[#allocation3 + $0x48] sm:$0xff]
    %v398 = vld [vmem:[#allocation3 + $0x50] sm:$0xff]
    %v399 = vld [vmem:[#allocation3 + $0x58] sm:$0xff]
    %v400 = vld [vmem:[#allocation3 + $0x60] sm:$0xff]
    %v401 = vld [vmem:[#allocation3 + $0x68] sm:$0xff]
    %v402 = vld [vmem:[#allocation3 + $0x70] sm:$0xff]
    %v403 = vld [vmem:[#allocation3 + $0x78] sm:$0xff]
    %404 = vmatpush.msra.mxu0 %v403
    %405 = vmatpush.msra.mxu0 %v402
    %406 = vmatpush.msra.mxu0 %v401
    %407 = vmatpush.msra.mxu0 %v400
    %408 = vmatpush.msra.mxu0 %v399
    %409 = vmatpush.msra.mxu0 %v398
    %410 = vmatpush.msra.mxu0 %v397
    %411 = vmatpush.msra.mxu0 %v396
    %412 = vmatpush.msra.mxu0 %v395
    %413 = vmatpush.msra.mxu0 %v394
    %414 = vmatpush.msra.mxu0 %v393
    %415 = vmatpush.msra.mxu0 %v392
    %416 = vmatpush.msra.mxu0 %v391
    %417 = vmatpush.msra.mxu0 %v390
    %418 = vmatpush.msra.mxu0 %v389
    %419 = vmatpush.msra.mxu0 %v388
    %420 = vmatmul.f32.gmra.mxu0 %v385
    %v421 = vpop.f32.mrf.mxu0
    %v422 = vadd.f32 0.0, %v421
    %423 = vdwg.mxu0
    %v424 = vadd.f32 %v387, %v422
    %v425 = vmax.f32 %v424, 0.0
    %426 = vst [vmem:[#allocation2 + $0x38] sm:$0xff] %v425
    %v427 = vld [vmem:[#allocation2 + $0x40] sm:$0xff]
    %v428 = vld [vmem:[#allocation3] sm:$0xff]
    %v429 = vld [vmem:[#allocation3 + $0x8] sm:$0xff]
    %v430 = vld [vmem:[#allocation3 + $0x10] sm:$0xff]
    %v431 = vld [vmem:[#allocation3 + $0x18] sm:$0xff]
    %v432 = vld [vmem:[#allocation3 + $0x20] sm:$0xff]
    %v433 = vld [vmem:[#allocation3 + $0x28] sm:$0xff]
    %v434 = vld [vmem:[#allocation3 + $0x30] sm:$0xff]
    %v435 = vld [vmem:[#allocation3 + $0x38] sm:$0xff]
    %v436 = vld [vmem:[#allocation3 + $0x40] sm:$0xff]
    %v437 = vld [vmem:[#allocation3 + $0x48] sm:$0xff]
    %v438 = vld [vmem:[#allocation3 + $0x50] sm:$0xff]
    %v439 = vld [vmem:[#allocation3 + $0x58] sm:$0xff]
    %v440 = vld [vmem:[#allocation3 + $0x60] sm:$0xff]
    %v441 = vld [vmem:[#allocation3 + $0x68] sm:$0xff]
    %v442 = vld [vmem:[#allocation3 + $0x70] sm:$0xff]
    %v443 = vld [vmem:[#allocation3 + $0x78] sm:$0xff]
    %444 = vmatpush.msra.mxu0 %v443
    %445 = vmatpush.msra.mxu0 %v442
    %446 = vmatpush.msra.mxu0 %v441
    %447 = vmatpush.msra.mxu0 %v440
    %448 = vmatpush.msra.mxu0 %v439
    %449 = vmatpush.msra.mxu0 %v438
    %450 = vmatpush.msra.mxu0 %v437
    %451 = vmatpush.msra.mxu0 %v436
    %452 = vmatpush.msra.mxu0 %v435
    %453 = vmatpush.msra.mxu0 %v434
    %454 = vmatpush.msra.mxu0 %v433
    %455 = vmatpush.msra.mxu0 %v432
    %456 = vmatpush.msra.mxu0 %v431
    %457 = vmatpush.msra.mxu0 %v430
    %458 = vmatpush.msra.mxu0 %v429
    %459 = vmatpush.msra.mxu0 %v428
    %460 = vmatmul.f32.gmra.mxu0 %v425
    %v461 = vpop.f32.mrf.mxu0
    %v462 = vadd.f32 0.0, %v461
    %463 = vdwg.mxu0
    %v464 = vadd.f32 %v427, %v462
    %v465 = vmax.f32 %v464, 0.0
    %466 = vst [vmem:[#allocation2 + $0x40] sm:$0xff] %v465
    %v467 = vld [vmem:[#allocation2] sm:$0xff]
    %v468 = vld [vmem:[#allocation2 + $0x8] sm:$0xff]
    %v469 = vld [vmem:[#allocation2 + $0x10] sm:$0xff]
    %v470 = vld [vmem:[#allocation2 + $0x18] sm:$0xff]
    %v471 = vld [vmem:[#allocation2 + $0x20] sm:$0xff]
    %v472 = vld [vmem:[#allocation2 + $0x28] sm:$0xff]
    %v473 = vld [vmem:[#allocation2 + $0x30] sm:$0xff]
    %v474 = vld [vmem:[#allocation2 + $0x38] sm:$0xff]
    %v475 = vld [vmem:[#allocation2 + $0x40] sm:$0xff]
    %v476 = vld [vmem:[#allocation2 + $0x48] sm:$0xff]
    %v477 = vld [vmem:[#allocation5] sm:$0xff]
    %v478 = vld [vmem:[#allocation5 + $0x8] sm:$0xff]
    %v479 = vld [vmem:[#allocation5 + $0x10] sm:$0xff]
    %v480 = vld [vmem:[#allocation5 + $0x18] sm:$0xff]
    %v481 = vld [vmem:[#allocation5 + $0x20] sm:$0xff]
    %v482 = vld [vmem:[#allocation5 + $0x28] sm:$0xff]
    %v483 = vld [vmem:[#allocation5 + $0x30] sm:$0xff]
    %v484 = vld [vmem:[#allocation5 + $0x38] sm:$0xff]
    %v485 = vld [vmem:[#allocation5 + $0x40] sm:$0xff]
    %v486 = vld [vmem:[#allocation5 + $0x48] sm:$0xff]
    %v487 = vld [vmem:[#allocation5 + $0x50] sm:$0xff]
    %v488 = vld [vmem:[#allocation5 + $0x58] sm:$0xff]
    %v489 = vld [vmem:[#allocation5 + $0x60] sm:$0xff]
    %v490 = vld [vmem:[#allocation5 + $0x68] sm:$0xff]
    %v491 = vld [vmem:[#allocation5 + $0x70] sm:$0xff]
    %v492 = vld [vmem:[#allocation5 + $0x78] sm:$0xff]
    %v493 = vld [vmem:[#allocation5 + $0x80] sm:$0xff]
    %v494 = vld [vmem:[#allocation5 + $0x88] sm:$0xff]
    %v495 = vld [vmem:[#allocation5 + $0x90] sm:$0xff]
    %v496 = vld [vmem:[#allocation5 + $0x98] sm:$0xff]
    %v497 = vld [vmem:[#allocation5 + $0xa0] sm:$0xff]
    %v498 = vld [vmem:[#allocation5 + $0xa8] sm:$0xff]
    %v499 = vld [vmem:[#allocation5 + $0xb0] sm:$0xff]
    %v500 = vld [vmem:[#allocation5 + $0xb8] sm:$0xff]
    %v501 = vld [vmem:[#allocation5 + $0xc0] sm:$0xff]
    %v502 = vld [vmem:[#allocation5 + $0xc8] sm:$0xff]
    %v503 = vld [vmem:[#allocation5 + $0xd0] sm:$0xff]
    %v504 = vld [vmem:[#allocation5 + $0xd8] sm:$0xff]
    %v505 = vld [vmem:[#allocation5 + $0xe0] sm:$0xff]
    %v506 = vld [vmem:[#allocation5 + $0xe8] sm:$0xff]
    %v507 = vld [vmem:[#allocation5 + $0xf0] sm:$0xff]
    %v508 = vld [vmem:[#allocation5 + $0xf8] sm:$0xff]
    %v509 = vld [vmem:[#allocation5 + $0x100] sm:$0xff]
    %v510 = vld [vmem:[#allocation5 + $0x108] sm:$0xff]
    %v511 = vld [vmem:[#allocation5 + $0x110] sm:$0xff]
    %v512 = vld [vmem:[#allocation5 + $0x118] sm:$0xff]
    %v513 = vld [vmem:[#allocation5 + $0x120] sm:$0xff]
    %v514 = vld [vmem:[#allocation5 + $0x128] sm:$0xff]
    %v515 = vld [vmem:[#allocation5 + $0x130] sm:$0xff]
    %v516 = vld [vmem:[#allocation5 + $0x138] sm:$0xff]
    %v517 = vld [vmem:[#allocation5 + $0x140] sm:$0xff]
    %v518 = vld [vmem:[#allocation5 + $0x148] sm:$0xff]
    %v519 = vld [vmem:[#allocation5 + $0x150] sm:$0xff]
    %v520 = vld [vmem:[#allocation5 + $0x158] sm:$0xff]
    %v521 = vld [vmem:[#allocation5 + $0x160] sm:$0xff]
    %v522 = vld [vmem:[#allocation5 + $0x168] sm:$0xff]
    %v523 = vld [vmem:[#allocation5 + $0x170] sm:$0xff]
    %v524 = vld [vmem:[#allocation5 + $0x178] sm:$0xff]
    %525 = vmatpush.msra.mxu0 %v522
    %526 = vmatpush.msra.mxu0 %v519
    %527 = vmatpush.msra.mxu0 %v516
    %528 = vmatpush.msra.mxu0 %v513
    %529 = vmatpush.msra.mxu0 %v510
    %530 = vmatpush.msra.mxu0 %v507
    %531 = vmatpush.msra.mxu0 %v504
    %532 = vmatpush.msra.mxu0 %v501
    %533 = vmatpush.msra.mxu0 %v498
    %534 = vmatpush.msra.mxu0 %v495
    %535 = vmatpush.msra.mxu0 %v492
    %536 = vmatpush.msra.mxu0 %v489
    %537 = vmatpush.msra.mxu0 %v486
    %538 = vmatpush.msra.mxu0 %v483
    %539 = vmatpush.msra.mxu0 %v480
    %540 = vmatpush.msra.mxu0 %v477
    %541 = vmatmul.f32.gmra.mxu0 %v467
    %v542 = vpop.f32.mrf.mxu0
    %v543 = vadd.f32 0.0, %v542
    %544 = vmatmul.f32.gmra.mxu0 %v468
    %v545 = vpop.f32.mrf.mxu0
    %v546 = vadd.f32 0.0, %v545
    %547 = vmatmul.f32.gmra.mxu0 %v469
    %v548 = vpop.f32.mrf.mxu0
    %v549 = vadd.f32 0.0, %v548
    %550 = vmatmul.f32.gmra.mxu0 %v470
    %v551 = vpop.f32.mrf.mxu0
    %v552 = vadd.f32 0.0, %v551
    %553 = vmatmul.f32.gmra.mxu0 %v471
    %v554 = vpop.f32.mrf.mxu0
    %v555 = vadd.f32 0.0, %v554
    %556 = vmatmul.f32.gmra.mxu0 %v472
    %v557 = vpop.f32.mrf.mxu0
    %v558 = vadd.f32 0.0, %v557
    %559 = vmatmul.f32.gmra.mxu0 %v473
    %v560 = vpop.f32.mrf.mxu0
    %v561 = vadd.f32 0.0, %v560
    %562 = vmatmul.f32.gmra.mxu0 %v474
    %v563 = vpop.f32.mrf.mxu0
    %v564 = vadd.f32 0.0, %v563
    %565 = vmatmul.f32.gmra.mxu0 %v475
    %v566 = vpop.f32.mrf.mxu0
    %567 = vmatmul.f32.gmra.mxu0 %v476
    %v568 = vpop.f32.mrf.mxu0
    %569 = vdwg.mxu0
    %570 = vmatpush.msra.mxu0 %v523
    %571 = vmatpush.msra.mxu0 %v520
    %572 = vmatpush.msra.mxu0 %v517
    %573 = vmatpush.msra.mxu0 %v514
    %574 = vmatpush.msra.mxu0 %v511
    %575 = vmatpush.msra.mxu0 %v508
    %576 = vmatpush.msra.mxu0 %v505
    %577 = vmatpush.msra.mxu0 %v502
    %578 = vmatpush.msra.mxu0 %v499
    %579 = vmatpush.msra.mxu0 %v496
    %580 = vmatpush.msra.mxu0 %v493
    %581 = vmatpush.msra.mxu0 %v490
    %582 = vmatpush.msra.mxu0 %v487
    %583 = vmatpush.msra.mxu0 %v484
    %584 = vmatpush.msra.mxu0 %v481
    %585 = vmatpush.msra.mxu0 %v478
    %586 = vmatmul.f32.gmra.mxu0 %v467
    %v587 = vpop.f32.mrf.mxu0
    %588 = vmatmul.f32.gmra.mxu0 %v468
    %v589 = vpop.f32.mrf.mxu0
    %v590 = vadd.f32 0.0, %v589
    %591 = vmatmul.f32.gmra.mxu0 %v469
    %v592 = vpop.f32.mrf.mxu0
    %v593 = vadd.f32 0.0, %v592
    %594 = vmatmul.f32.gmra.mxu0 %v470
    %v595 = vpop.f32.mrf.mxu0
    %v596 = vadd.f32 0.0, %v595
    %597 = vmatmul.f32.gmra.mxu0 %v471
    %v598 = vpop.f32.mrf.mxu0
    %v599 = vadd.f32 0.0, %v598
    %600 = vmatmul.f32.gmra.mxu0 %v472
    %v601 = vpop.f32.mrf.mxu0
    %v602 = vadd.f32 0.0, %v601
    %603 = vmatmul.f32.gmra.mxu0 %v473
    %v604 = vpop.f32.mrf.mxu0
    %v605 = vadd.f32 0.0, %v604
    %606 = vmatmul.f32.gmra.mxu0 %v474
    %v607 = vpop.f32.mrf.mxu0
    %v608 = vadd.f32 0.0, %v607
    %609 = vmatmul.f32.gmra.mxu0 %v475
    %v610 = vpop.f32.mrf.mxu0
    %v611 = vadd.f32 0.0, %v610
    %612 = vmatmul.f32.gmra.mxu0 %v476
    %v613 = vpop.f32.mrf.mxu0
    %614 = vdwg.mxu0
    %615 = vmatpush.msra.mxu0 %v524
    %616 = vmatpush.msra.mxu0 %v521
    %617 = vmatpush.msra.mxu0 %v518
    %618 = vmatpush.msra.mxu0 %v515
    %619 = vmatpush.msra.mxu0 %v512
    %620 = vmatpush.msra.mxu0 %v509
    %621 = vmatpush.msra.mxu0 %v506
    %622 = vmatpush.msra.mxu0 %v503
    %623 = vmatpush.msra.mxu0 %v500
    %624 = vmatpush.msra.mxu0 %v497
    %625 = vmatpush.msra.mxu0 %v494
    %626 = vmatpush.msra.mxu0 %v491
    %627 = vmatpush.msra.mxu0 %v488
    %628 = vmatpush.msra.mxu0 %v485
    %629 = vmatpush.msra.mxu0 %v482
    %630 = vmatpush.msra.mxu0 %v479
    %631 = vmatmul.f32.gmra.mxu0 %v467
    %v632 = vpop.f32.mrf.mxu0
    %633 = vmatmul.f32.gmra.mxu0 %v468
    %v634 = vpop.f32.mrf.mxu0
    %635 = vmatmul.f32.gmra.mxu0 %v469
    %v636 = vpop.f32.mrf.mxu0
    %v637 = vadd.f32 0.0, %v636
    %638 = vmatmul.f32.gmra.mxu0 %v470
    %v639 = vpop.f32.mrf.mxu0
    %v640 = vadd.f32 0.0, %v639
    %641 = vmatmul.f32.gmra.mxu0 %v471
    %v642 = vpop.f32.mrf.mxu0
    %v643 = vadd.f32 0.0, %v642
    %644 = vmatmul.f32.gmra.mxu0 %v472
    %v645 = vpop.f32.mrf.mxu0
    %v646 = vadd.f32 0.0, %v645
    %647 = vmatmul.f32.gmra.mxu0 %v473
    %v648 = vpop.f32.mrf.mxu0
    %v649 = vadd.f32 0.0, %v648
    %650 = vmatmul.f32.gmra.mxu0 %v474
    %v651 = vpop.f32.mrf.mxu0
    %v652 = vadd.f32 0.0, %v651
    %653 = vmatmul.f32.gmra.mxu0 %v475
    %v654 = vpop.f32.mrf.mxu0
    %v655 = vadd.f32 0.0, %v654
    %656 = vmatmul.f32.gmra.mxu0 %v476
    %v657 = vpop.f32.mrf.mxu0
    %v658 = vadd.f32 0.0, %v657
    %659 = vdwg.mxu0
    %v660 = vadd.f32 %v543, %v590
    %v661 = vadd.f32 %v546, %v593
    %v662 = vadd.f32 %v549, %v596
    %v663 = vadd.f32 %v552, %v599
    %v664 = vadd.f32 %v555, %v602
    %v665 = vadd.f32 %v558, %v605
    %v666 = vadd.f32 %v561, %v608
    %v667 = vadd.f32 %v564, %v611
    %v668 = vadd.f32 %v660, %v637
    %v669 = vadd.f32 %v661, %v640
    %v670 = vadd.f32 %v662, %v643
    %v671 = vadd.f32 %v663, %v646
    %v672 = vadd.f32 %v664, %v649
    %v673 = vadd.f32 %v665, %v652
    %v674 = vadd.f32 %v666, %v655
    %v675 = vadd.f32 %v667, %v658
    %v676 = vld [vmem:[%s5] sm:$0x1]
    %v678 = vperm.slane %v676, 0
    %v680 = vadd.f32 %v668, %v678
    %v681 = vadd.f32 %v669, %v678
    %v682 = vadd.f32 %v670, %v678
    %v683 = vadd.f32 %v671, %v678
    %v684 = vadd.f32 %v672, %v678
    %v685 = vadd.f32 %v673, %v678
    %v686 = vadd.f32 %v674, %v678
    %v687 = vadd.f32 %v675, %v678
    %v688 = vmax.f32 %v680, 0.0
    %v689 = vmax.f32 %v681, 0.0
    %v690 = vmax.f32 %v682, 0.0
    %v691 = vmax.f32 %v683, 0.0
    %v692 = vmax.f32 %v684, 0.0
    %v693 = vmax.f32 %v685, 0.0
    %v694 = vmax.f32 %v686, 0.0
    %v695 = vmax.f32 %v687, 0.0
    %v696 = vmax.f32 %v688, %v692
    %v697 = vmax.f32 %v689, %v693
    %v698 = vmax.f32 %v690, %v694
    %v699 = vmax.f32 %v691, %v695
    %v700 = vmax.f32 %v696, %v697
    %v701 = vmax.f32 %v698, %v699
    %v702 = vmax.f32 %v700, %v701
    %703 = vst [vmem:[%s6] sm:$0xff] %v702
    // Predicated region
    $region34: #{encoder_lstm_apply.1} parent=1 // pred_check
      _
    $region35: #{encoder_lstm_apply.1} parent=1 // pred_check_branch
      %705 = sbr.rel (0) target = $region37
    $region36: #{encoder_lstm_apply.1} parent=1 // pred_region
      _
    $region37: #{encoder_lstm_apply.1} parent=1 // pred_fallthru
      _
    // Predicated region
    $region38: #{encoder_lstm_apply.1} parent=1 // pred_check
      _
    $region39: #{encoder_lstm_apply.1} parent=1 // pred_check_branch
      %707 = sbr.rel (0) target = $region41
    $region40: #{encoder_lstm_apply.1} parent=1 // pred_region
      _
    $region41: #{encoder_lstm_apply.1} parent=1 // pred_fallthru
      _
    %708 = vsyncpa [#allocation4], 1
    %709 = vsyncpa [#allocation6], 1

</llo_original>
